<compile_context>
chip_gen: v5e
topology: v5e:2x2
jax: 0.10.0
libtpu: 0.0.40
codegen_flags: <defaults>
</compile_context>

<pallas_src>
import functools

import jax
import jax.numpy as jnp
from jax.experimental import pallas as pl
from jax.experimental.pallas import tpu as pltpu


def mlp_kernel(x_ref,
               w1_ref, b1_ref,
               w2_ref, b2_ref,
               w3_ref, b3_ref,
               w4_ref, b4_ref,
               o_ref,
               *, compute_dtype):
    # Whole 4-layer MLP fused into one kernel per batch tile.
    x = x_ref[...].astype(compute_dtype)

    h1 = jnp.dot(x, w1_ref[...], preferred_element_type=jnp.float32) + b1_ref[...]
    h1 = jnp.maximum(h1, 0.0)

    h2 = jnp.dot(h1.astype(compute_dtype), w2_ref[...],
                 preferred_element_type=jnp.float32) + b2_ref[...]
    h2 = jnp.maximum(h2, 0.0)

    h3 = jnp.dot(h2.astype(compute_dtype), w3_ref[...],
                 preferred_element_type=jnp.float32) + b3_ref[...]
    h3 = jnp.maximum(h3, 0.0)

    # Final 16->1 projection: an N=1 matmul would burn a full MXU pass for a
    # single useful lane, so do it as a VPU multiply + XLU lane reduce (f32).
    y = jnp.sum(h3 * w4_ref[...], axis=-1, keepdims=True) + b4_ref[...]
    o_ref[...] = jnp.tanh(y).astype(o_ref.dtype)


def _choose_tile(batch, tb):
    """Clamp the batch tile: <= batch, multiple of 8, and prefer >= 2 grid
    steps so v7x's two TensorCores both get a share of the batch axis."""
    tb = min(tb, batch)
    if batch >= 16 and tb > batch // 2:
        tb = batch // 2
    if tb != batch:
        tb = max(8, (tb // 8) * 8)
    return tb


def action_predicter_dense(x, params, *, tb=512, compute_dtype=jnp.bfloat16):
    """x: (B, 64) float32. params: w1..w3 as (in,out), w4 as (1,16) (PyTorch
    layout), biases as (1,out). Returns (B, 1) in x.dtype."""
    B, D_in = x.shape
    assert D_in == 64

    tb = _choose_tile(B, tb)
    B_pad = ((B + tb - 1) // tb) * tb
    x_in = jnp.pad(x, ((0, B_pad - B), (0, 0))) if B_pad != B else x

    # Matmul weights go to the MXU in the compute dtype; the tiny final
    # projection (VPU reduce) and all biases stay f32.
    w1 = params["w1"].astype(compute_dtype)
    w2 = params["w2"].astype(compute_dtype)
    w3 = params["w3"].astype(compute_dtype)
    b1, b2, b3 = params["b1"], params["b2"], params["b3"]
    w4, b4 = params["w4"], params["b4"]

    def whole(shape):
        # Small weight/bias tensors: single block, same index for every grid
        # step, so they are DMA'd into VMEM once and stay resident.
        return pl.BlockSpec(shape, lambda i: (0,) * len(shape))

    out = pl.pallas_call(
        functools.partial(mlp_kernel, compute_dtype=compute_dtype),
        out_shape=jax.ShapeDtypeStruct((B_pad, 1), x.dtype),
        grid_spec=pl.GridSpec(
            grid=(B_pad // tb,),
            in_specs=[
                pl.BlockSpec((tb, 64), lambda i: (i, 0)),   # x batch tile
                whole(w1.shape), whole(b1.shape),
                whole(w2.shape), whole(b2.shape),
                whole(w3.shape), whole(b3.shape),
                whole(w4.shape), whole(b4.shape),
            ],
            out_specs=pl.BlockSpec((tb, 1), lambda i: (i, 0)),
        ),
        compiler_params=pltpu.CompilerParams(
            dimension_semantics=("parallel",)),
    )(x_in, w1, b1, w2, b2, w3, b3, w4, b4)

    return out[:B] if B_pad != B else out


def init_params(key):
    """Deterministic init mirroring torch.nn.Linear default (uniform
    +-1/sqrt(fan_in)). w1..w3 stored as (in, out) = PyTorch weight.T; w4 kept
    in PyTorch (out, in) = (1, 16); biases as (1, out)."""
    dims = [(64, 128), (128, 64), (64, 16), (16, 1)]
    params = {}
    for idx, (fan_in, fan_out) in enumerate(dims, start=1):
        key, kw, kb = jax.random.split(key, 3)
        bound = 1.0 / jnp.sqrt(jnp.float32(fan_in))
        wshape = (fan_in, fan_out) if idx < 4 else (fan_out, fan_in)
        params[f"w{idx}"] = jax.random.uniform(
            kw, wshape, jnp.float32, -bound, bound)
        params[f"b{idx}"] = jax.random.uniform(
            kb, (1, fan_out), jnp.float32, -bound, bound)
    return params


def reference(x, p):
    h = jnp.maximum(x @ p["w1"] + p["b1"], 0.0)
    h = jnp.maximum(h @ p["w2"] + p["b2"], 0.0)
    h = jnp.maximum(h @ p["w3"] + p["b3"], 0.0)
    return jnp.tanh(h @ p["w4"].T + p["b4"])


if __name__ == "__main__":
    key = jax.random.PRNGKey(0)
    key, kx_small, kx_big = jax.random.split(key, 3)
    params = init_params(key)

    # Small batch: exercises tile clamping (tb -> 8) and a 2-step grid.
    x_small = jax.random.normal(kx_small, (16, 64), jnp.float32)
    out_small = jax.block_until_ready(action_predicter_dense(x_small, params))
    ref_small = reference(x_small, params)
    assert out_small.shape == (16, 1)
    assert jnp.allclose(out_small, ref_small, atol=2e-2, rtol=2e-2)

    # Larger batch: exercises the default 512-row tile / 2-step parallel grid.
    x_big = jax.random.normal(kx_big, (1024, 64), jnp.float32)
    out_big = jax.block_until_ready(action_predicter_dense(x_big, params))
    ref_big = reference(x_big, params)
    assert out_big.shape == (1024, 1)
    assert jnp.allclose(out_big, ref_big, atol=2e-2, rtol=2e-2)

    print("KERNEL_OK")
</pallas_src>

<mosaic_0001>
module attributes {stable_mosaic.version = 11 : i64} {
  func.func @mlp_kernel(%arg0: i32, %arg1: memref<8x64xf32, #tpu.memory_space<vmem>>, %arg2: memref<64x128xbf16, #tpu.memory_space<vmem>>, %arg3: memref<1x128xf32, #tpu.memory_space<vmem>>, %arg4: memref<128x64xbf16, #tpu.memory_space<vmem>>, %arg5: memref<1x64xf32, #tpu.memory_space<vmem>>, %arg6: memref<64x16xbf16, #tpu.memory_space<vmem>>, %arg7: memref<1x16xf32, #tpu.memory_space<vmem>>, %arg8: memref<1x16xf32, #tpu.memory_space<vmem>>, %arg9: memref<1x1xf32, #tpu.memory_space<vmem>>, %arg10: memref<8x1xf32, #tpu.memory_space<vmem>>) attributes {dimension_semantics = [#tpu.dimension_semantics<parallel>], iteration_bounds = array<i64: 2>, scalar_prefetch = 0 : i64, scratch_operands = 0 : i64, tpu.core_type = #tpu.core_type<tc>, window_params = [{transform_indices = @transform_0, window_bounds = array<i64: 8, 64>}, {pipeline_mode = #tpu.pipeline_mode<synchronous>, transform_indices = @transform_1, window_bounds = array<i64: 64, 128>}, {pipeline_mode = #tpu.pipeline_mode<synchronous>, transform_indices = @transform_2, window_bounds = array<i64: 1, 128>}, {pipeline_mode = #tpu.pipeline_mode<synchronous>, transform_indices = @transform_3, window_bounds = array<i64: 128, 64>}, {pipeline_mode = #tpu.pipeline_mode<synchronous>, transform_indices = @transform_4, window_bounds = array<i64: 1, 64>}, {pipeline_mode = #tpu.pipeline_mode<synchronous>, transform_indices = @transform_5, window_bounds = array<i64: 64, 16>}, {pipeline_mode = #tpu.pipeline_mode<synchronous>, transform_indices = @transform_6, window_bounds = array<i64: 1, 16>}, {pipeline_mode = #tpu.pipeline_mode<synchronous>, transform_indices = @transform_7, window_bounds = array<i64: 1, 16>}, {pipeline_mode = #tpu.pipeline_mode<synchronous>, transform_indices = @transform_8, window_bounds = array<i64: 1, 1>}, {transform_indices = @transform_9, window_bounds = array<i64: 8, 1>}]} {
    %c0 = arith.constant 0 : index
    %c0_0 = arith.constant 0 : index
    %0 = vector.load %arg1[%c0, %c0_0] : memref<8x64xf32, #tpu.memory_space<vmem>>, vector<8x64xf32>
    %1 = arith.truncf %0 : vector<8x64xf32> to vector<8x64xbf16>
    %c0_1 = arith.constant 0 : index
    %c0_2 = arith.constant 0 : index
    %2 = vector.load %arg2[%c0_1, %c0_2] : memref<64x128xbf16, #tpu.memory_space<vmem>>, vector<64x128xbf16>
    %cst = arith.constant dense<0.000000e+00> : vector<8x128xf32>
    %3 = tpu.matmul %1, %2, %cst {dimension_numbers = #tpu.dot_dimension_numbers<[1], [0], [0], [1], [0, 0, 1, 1], [], []>} : vector<8x64xbf16>, vector<64x128xbf16>, vector<8x128xf32> -> vector<8x128xf32>
    %c0_3 = arith.constant 0 : index
    %c0_4 = arith.constant 0 : index
    %4 = vector.load %arg3[%c0_3, %c0_4] : memref<1x128xf32, #tpu.memory_space<vmem>>, vector<1x128xf32>
    %5 = vector.broadcast %4 : vector<1x128xf32> to vector<8x128xf32>
    %6 = arith.addf %3, %5 : vector<8x128xf32>
    %cst_5 = arith.constant 0.000000e+00 : f32
    %7 = vector.broadcast %cst_5 : f32 to vector<8x128xf32>
    %8 = arith.maximumf %6, %7 : vector<8x128xf32>
    %9 = arith.truncf %8 : vector<8x128xf32> to vector<8x128xbf16>
    %c0_6 = arith.constant 0 : index
    %c0_7 = arith.constant 0 : index
    %10 = vector.load %arg4[%c0_6, %c0_7] : memref<128x64xbf16, #tpu.memory_space<vmem>>, vector<128x64xbf16>
    %cst_8 = arith.constant dense<0.000000e+00> : vector<8x64xf32>
    %11 = tpu.matmul %9, %10, %cst_8 {dimension_numbers = #tpu.dot_dimension_numbers<[1], [0], [0], [1], [0, 0, 1, 1], [], []>} : vector<8x128xbf16>, vector<128x64xbf16>, vector<8x64xf32> -> vector<8x64xf32>
    %c0_9 = arith.constant 0 : index
    %c0_10 = arith.constant 0 : index
    %12 = vector.load %arg5[%c0_9, %c0_10] : memref<1x64xf32, #tpu.memory_space<vmem>>, vector<1x64xf32>
    %13 = vector.broadcast %12 : vector<1x64xf32> to vector<8x64xf32>
    %14 = arith.addf %11, %13 : vector<8x64xf32>
    %cst_11 = arith.constant 0.000000e+00 : f32
    %15 = vector.broadcast %cst_11 : f32 to vector<8x64xf32>
    %16 = arith.maximumf %14, %15 : vector<8x64xf32>
    %17 = arith.truncf %16 : vector<8x64xf32> to vector<8x64xbf16>
    %c0_12 = arith.constant 0 : index
    %c0_13 = arith.constant 0 : index
    %18 = vector.load %arg6[%c0_12, %c0_13] : memref<64x16xbf16, #tpu.memory_space<vmem>>, vector<64x16xbf16>
    %cst_14 = arith.constant dense<0.000000e+00> : vector<8x16xf32>
    %19 = tpu.matmul %17, %18, %cst_14 {dimension_numbers = #tpu.dot_dimension_numbers<[1], [0], [0], [1], [0, 0, 1, 1], [], []>} : vector<8x64xbf16>, vector<64x16xbf16>, vector<8x16xf32> -> vector<8x16xf32>
    %c0_15 = arith.constant 0 : index
    %c0_16 = arith.constant 0 : index
    %20 = vector.load %arg7[%c0_15, %c0_16] : memref<1x16xf32, #tpu.memory_space<vmem>>, vector<1x16xf32>
    %21 = vector.broadcast %20 : vector<1x16xf32> to vector<8x16xf32>
    %22 = arith.addf %19, %21 : vector<8x16xf32>
    %cst_17 = arith.constant 0.000000e+00 : f32
    %23 = vector.broadcast %cst_17 : f32 to vector<8x16xf32>
    %24 = arith.maximumf %22, %23 : vector<8x16xf32>
    %c0_18 = arith.constant 0 : index
    %c0_19 = arith.constant 0 : index
    %25 = vector.load %arg8[%c0_18, %c0_19] : memref<1x16xf32, #tpu.memory_space<vmem>>, vector<1x16xf32>
    %26 = vector.broadcast %25 : vector<1x16xf32> to vector<8x16xf32>
    %27 = arith.mulf %24, %26 : vector<8x16xf32>
    %cst_20 = arith.constant dense<0.000000e+00> : vector<8xf32>
    %28 = vector.multi_reduction <add>, %27, %cst_20 [1] : vector<8x16xf32> to vector<8xf32>
    %29 = vector.shape_cast %28 : vector<8xf32> to vector<8x1xf32>
    %c0_21 = arith.constant 0 : index
    %c0_22 = arith.constant 0 : index
    %30 = vector.load %arg9[%c0_21, %c0_22] : memref<1x1xf32, #tpu.memory_space<vmem>>, vector<1x1xf32>
    %31 = vector.broadcast %30 : vector<1x1xf32> to vector<8x1xf32>
    %32 = arith.addf %29, %31 : vector<8x1xf32>
    %33 = math.tanh %32 : vector<8x1xf32>
    %c0_23 = arith.constant 0 : index
    %c0_24 = arith.constant 0 : index
    %34 = vector.load %arg10[%c0_23, %c0_24] : memref<8x1xf32, #tpu.memory_space<vmem>>, vector<8x1xf32>
    tpu.vector_store %arg10[%c0_23, %c0_24], %33 {strides = array<i32>} : memref<8x1xf32, #tpu.memory_space<vmem>>, vector<8x1xf32>,
    return
  }
  func.func @transform_0(%arg0: i32) -> (i32, i32) {
    %c0_i32 = arith.constant 0 : i32
    %c0_i32_0 = arith.constant 0 : i32
    return %arg0, %c0_i32 : i32, i32
  }
  func.func @transform_1(%arg0: i32) -> (i32, i32) {
    %c0_i32 = arith.constant 0 : i32
    %c0_i32_0 = arith.constant 0 : i32
    %c0_i32_1 = arith.constant 0 : i32
    return %c0_i32, %c0_i32_0 : i32, i32
  }
  func.func @transform_2(%arg0: i32) -> (i32, i32) {
    %c0_i32 = arith.constant 0 : i32
    %c0_i32_0 = arith.constant 0 : i32
    %c0_i32_1 = arith.constant 0 : i32
    return %c0_i32, %c0_i32_0 : i32, i32
  }
  func.func @transform_3(%arg0: i32) -> (i32, i32) {
    %c0_i32 = arith.constant 0 : i32
    %c0_i32_0 = arith.constant 0 : i32
    %c0_i32_1 = arith.constant 0 : i32
    return %c0_i32, %c0_i32_0 : i32, i32
  }
  func.func @transform_4(%arg0: i32) -> (i32, i32) {
    %c0_i32 = arith.constant 0 : i32
    %c0_i32_0 = arith.constant 0 : i32
    %c0_i32_1 = arith.constant 0 : i32
    return %c0_i32, %c0_i32_0 : i32, i32
  }
  func.func @transform_5(%arg0: i32) -> (i32, i32) {
    %c0_i32 = arith.constant 0 : i32
    %c0_i32_0 = arith.constant 0 : i32
    %c0_i32_1 = arith.constant 0 : i32
    return %c0_i32, %c0_i32_0 : i32, i32
  }
  func.func @transform_6(%arg0: i32) -> (i32, i32) {
    %c0_i32 = arith.constant 0 : i32
    %c0_i32_0 = arith.constant 0 : i32
    %c0_i32_1 = arith.constant 0 : i32
    return %c0_i32, %c0_i32_0 : i32, i32
  }
  func.func @transform_7(%arg0: i32) -> (i32, i32) {
    %c0_i32 = arith.constant 0 : i32
    %c0_i32_0 = arith.constant 0 : i32
    %c0_i32_1 = arith.constant 0 : i32
    return %c0_i32, %c0_i32_0 : i32, i32
  }
  func.func @transform_8(%arg0: i32) -> (i32, i32) {
    %c0_i32 = arith.constant 0 : i32
    %c0_i32_0 = arith.constant 0 : i32
    %c0_i32_1 = arith.constant 0 : i32
    return %c0_i32, %c0_i32_0 : i32, i32
  }
  func.func @transform_9(%arg0: i32) -> (i32, i32) {
    %c0_i32 = arith.constant 0 : i32
    %c0_i32_0 = arith.constant 0 : i32
    return %arg0, %c0_i32 : i32, i32
  }
}

</mosaic_0001>

<llo_original>
// kernel: tpu_custom_call.1
$region0: #{tpu_custom_call.1}
  #allocation0 [shape = 'u32[]', space=smem, size = 0x4, offset = 0x4, fixed_abs, tag = 'smem constant byte address 0x4 - core index']
  #allocation1 [shape = 'u32[72,128]{1,0:T(1,128)}', space=vmem, size = 0x9000, scoped, tag = 'internal scratch']
  #allocation2 [shape = 'f32[1,1]{1,0:T(1,128)S(1)}', space=vmem, size = 0x200, scoped, tag = 'scoped memory for tpu_custom_call.1']
  %s0 = inlined_call_operand.vmem [shape: f32[16,64], index: 0, kind: input, shape index: {}]
  %s1 = inlined_call_operand.vmem [shape: bf16[64,128], index: 1, kind: input, shape index: {}]
  %s2 = inlined_call_operand.vmem [shape: f32[1,128], index: 2, kind: input, shape index: {}]
  %s3 = inlined_call_operand.vmem [shape: bf16[128,64], index: 3, kind: input, shape index: {}]
  %s4 = inlined_call_operand.vmem [shape: f32[1,64], index: 4, kind: input, shape index: {}]
  %s5 = inlined_call_operand.vmem [shape: bf16[64,16], index: 5, kind: input, shape index: {}]
  %s6 = inlined_call_operand.vmem [shape: f32[1,16], index: 6, kind: input, shape index: {}]
  %s7 = inlined_call_operand.vmem [shape: f32[1,16], index: 7, kind: input, shape index: {}]
  %s8 = inlined_call_operand.<no memory space> [shape: f32[1,1], index: 8, kind: input, shape index: {}]
  %s9 = inlined_call_operand.vmem [shape: f32[16,1], index: 9, kind: output, shape index: {}]
  %s10 = sld [smem:[#allocation0]]
  $region69: #{tpu_custom_call.1} parent=0
    _
  %s12 = ssub.s32 1, %s10
  %s13 = scalar_select 0, %s12, %s10
  %v14 = vstv %s8
  %15 = vst [vmem:[#allocation2] sm:$0x1] %v14
  loop: start=0, step=1, limit=4
  $region2: #{tpu_custom_call.1} parent=0 // loop_pre_header
    _
  $region3: #{tpu_custom_call.1} parent=0 // loop_header
    %s17 = sphi 0, %s21
    %p18 = scmp.ge.s32.totalorder %s17, 4
    %s27 = sphi 0, %s29
    %s30 = sphi 0, %s27
    %s31 = sphi 0, %s30
    %s47 = sphi 0, %s31
    %s51 = sphi 0, %s51
    %s53 = sphi 0, %s51
    %s54 = sphi 0, %s53
    %s68 = sphi 0, %s54
    %s72 = sphi 0, %s72
    %s74 = sphi 0, %s72
    %s75 = sphi 0, %s74
    %s89 = sphi 0, %s75
    %s93 = sphi 0, %s93
    %s95 = sphi 0, %s93
    %s96 = sphi 0, %s95
    %s110 = sphi 0, %s96
    %s114 = sphi 0, %s114
    %s116 = sphi 0, %s114
    %s117 = sphi 0, %s116
    %s131 = sphi 0, %s117
    %s135 = sphi 0, %s135
    %s137 = sphi 0, %s135
    %s138 = sphi 0, %s137
    %s152 = sphi 0, %s138
    %s156 = sphi 0, %s156
    %s158 = sphi 0, %s156
    %s159 = sphi 0, %s158
    %s173 = sphi 0, %s159
    %s177 = sphi 0, %s177
    %s179 = sphi 0, %s177
    %s180 = sphi 0, %s179
    %s194 = sphi 0, %s180
    %s198 = sphi 0, %s198
    %s200 = sphi 0, %s198
    %s201 = sphi 0, %s200
    %s215 = sphi 0, %s201
    %s221 = sphi 0, %s223
    %s224 = sphi 0, %s221
    %s225 = sphi 0, %s224
    %s241 = sphi 0, %s225
  $region4: #{tpu_custom_call.1} parent=0 // loop_header_branch
    %20 = sbr.rel (%p18) target = $region8
  $region5: #{tpu_custom_call.1} parent=0 // loop_body
    %s22 = ssub.s32 %s17, 1
    %s23 = ssub.s32 %s17, 2
    %s24 = sadd.s32 %s17, 1
    %s25 = ssub.s32 %s17, %s24
    %p26 = scmp.eq.s32.totalorder %s25, 0
    %s28 = sadd.s32 %s27, 1
    %s29 = scalar_select %p26, %s27, %s28
    %p32 = pneg %p26
    %p33 = scmp.eq.s32.totalorder %s17, 1
    %p34 = por %p32, %p33
    %p35 = scmp.ne.s32.totalorder %s27, %s30
    %p36 = scmp.eq.s32.totalorder %s17, 0
    %p37 = por %p35, %p36
    %p38 = scmp.ne.s32.totalorder %s27, %s30
    %p39 = scmp.eq.s32.totalorder %s22, 1
    %p40 = por %p38, %p39
    %p41 = scmp.ne.s32.totalorder %s30, %s31
    %p42 = scmp.eq.s32.totalorder %s22, 0
    %p43 = por %p41, %p42
    %p44 = scmp.ne.s32.totalorder %s30, %s31
    %p45 = scmp.eq.s32.totalorder %s23, 1
    %p46 = por %p44, %p45
    %p48 = scmp.ne.s32.totalorder %s31, %s47
    %p49 = scmp.eq.s32.totalorder %s23, 0
    %p50 = por %p48, %p49
    %s52 = sadd.s32 %s51, 1
    %p55 = scmp.eq.s32.totalorder %s17, 1
    %p56 = scmp.ne.s32.totalorder %s51, %s53
    %p57 = scmp.eq.s32.totalorder %s17, 0
    %p58 = por %p56, %p57
    %p59 = scmp.ne.s32.totalorder %s51, %s53
    %p60 = scmp.eq.s32.totalorder %s22, 1
    %p61 = por %p59, %p60
    %p62 = scmp.ne.s32.totalorder %s53, %s54
    %p63 = scmp.eq.s32.totalorder %s22, 0
    %p64 = por %p62, %p63
    %p65 = scmp.ne.s32.totalorder %s53, %s54
    %p66 = scmp.eq.s32.totalorder %s23, 1
    %p67 = por %p65, %p66
    %p69 = scmp.ne.s32.totalorder %s54, %s68
    %p70 = scmp.eq.s32.totalorder %s23, 0
    %p71 = por %p69, %p70
    %s73 = sadd.s32 %s72, 1
    %p76 = scmp.eq.s32.totalorder %s17, 1
    %p77 = scmp.ne.s32.totalorder %s72, %s74
    %p78 = scmp.eq.s32.totalorder %s17, 0
    %p79 = por %p77, %p78
    %p80 = scmp.ne.s32.totalorder %s72, %s74
    %p81 = scmp.eq.s32.totalorder %s22, 1
    %p82 = por %p80, %p81
    %p83 = scmp.ne.s32.totalorder %s74, %s75
    %p84 = scmp.eq.s32.totalorder %s22, 0
    %p85 = por %p83, %p84
    %p86 = scmp.ne.s32.totalorder %s74, %s75
    %p87 = scmp.eq.s32.totalorder %s23, 1
    %p88 = por %p86, %p87
    %p90 = scmp.ne.s32.totalorder %s75, %s89
    %p91 = scmp.eq.s32.totalorder %s23, 0
    %p92 = por %p90, %p91
    %s94 = sadd.s32 %s93, 1
    %p97 = scmp.eq.s32.totalorder %s17, 1
    %p98 = scmp.ne.s32.totalorder %s93, %s95
    %p99 = scmp.eq.s32.totalorder %s17, 0
    %p100 = por %p98, %p99
    %p101 = scmp.ne.s32.totalorder %s93, %s95
    %p102 = scmp.eq.s32.totalorder %s22, 1
    %p103 = por %p101, %p102
    %p104 = scmp.ne.s32.totalorder %s95, %s96
    %p105 = scmp.eq.s32.totalorder %s22, 0
    %p106 = por %p104, %p105
    %p107 = scmp.ne.s32.totalorder %s95, %s96
    %p108 = scmp.eq.s32.totalorder %s23, 1
    %p109 = por %p107, %p108
    %p111 = scmp.ne.s32.totalorder %s96, %s110
    %p112 = scmp.eq.s32.totalorder %s23, 0
    %p113 = por %p111, %p112
    %s115 = sadd.s32 %s114, 1
    %p118 = scmp.eq.s32.totalorder %s17, 1
    %p119 = scmp.ne.s32.totalorder %s114, %s116
    %p120 = scmp.eq.s32.totalorder %s17, 0
    %p121 = por %p119, %p120
    %p122 = scmp.ne.s32.totalorder %s114, %s116
    %p123 = scmp.eq.s32.totalorder %s22, 1
    %p124 = por %p122, %p123
    %p125 = scmp.ne.s32.totalorder %s116, %s117
    %p126 = scmp.eq.s32.totalorder %s22, 0
    %p127 = por %p125, %p126
    %p128 = scmp.ne.s32.totalorder %s116, %s117
    %p129 = scmp.eq.s32.totalorder %s23, 1
    %p130 = por %p128, %p129
    %p132 = scmp.ne.s32.totalorder %s117, %s131
    %p133 = scmp.eq.s32.totalorder %s23, 0
    %p134 = por %p132, %p133
    %s136 = sadd.s32 %s135, 1
    %p139 = scmp.eq.s32.totalorder %s17, 1
    %p140 = scmp.ne.s32.totalorder %s135, %s137
    %p141 = scmp.eq.s32.totalorder %s17, 0
    %p142 = por %p140, %p141
    %p143 = scmp.ne.s32.totalorder %s135, %s137
    %p144 = scmp.eq.s32.totalorder %s22, 1
    %p145 = por %p143, %p144
    %p146 = scmp.ne.s32.totalorder %s137, %s138
    %p147 = scmp.eq.s32.totalorder %s22, 0
    %p148 = por %p146, %p147
    %p149 = scmp.ne.s32.totalorder %s137, %s138
    %p150 = scmp.eq.s32.totalorder %s23, 1
    %p151 = por %p149, %p150
    %p153 = scmp.ne.s32.totalorder %s138, %s152
    %p154 = scmp.eq.s32.totalorder %s23, 0
    %p155 = por %p153, %p154
    %s157 = sadd.s32 %s156, 1
    %p160 = scmp.eq.s32.totalorder %s17, 1
    %p161 = scmp.ne.s32.totalorder %s156, %s158
    %p162 = scmp.eq.s32.totalorder %s17, 0
    %p163 = por %p161, %p162
    %p164 = scmp.ne.s32.totalorder %s156, %s158
    %p165 = scmp.eq.s32.totalorder %s22, 1
    %p166 = por %p164, %p165
    %p167 = scmp.ne.s32.totalorder %s158, %s159
    %p168 = scmp.eq.s32.totalorder %s22, 0
    %p169 = por %p167, %p168
    %p170 = scmp.ne.s32.totalorder %s158, %s159
    %p171 = scmp.eq.s32.totalorder %s23, 1
    %p172 = por %p170, %p171
    %p174 = scmp.ne.s32.totalorder %s159, %s173
    %p175 = scmp.eq.s32.totalorder %s23, 0
    %p176 = por %p174, %p175
    %s178 = sadd.s32 %s177, 1
    %p181 = scmp.eq.s32.totalorder %s17, 1
    %p182 = scmp.ne.s32.totalorder %s177, %s179
    %p183 = scmp.eq.s32.totalorder %s17, 0
    %p184 = por %p182, %p183
    %p185 = scmp.ne.s32.totalorder %s177, %s179
    %p186 = scmp.eq.s32.totalorder %s22, 1
    %p187 = por %p185, %p186
    %p188 = scmp.ne.s32.totalorder %s179, %s180
    %p189 = scmp.eq.s32.totalorder %s22, 0
    %p190 = por %p188, %p189
    %p191 = scmp.ne.s32.totalorder %s179, %s180
    %p192 = scmp.eq.s32.totalorder %s23, 1
    %p193 = por %p191, %p192
    %p195 = scmp.ne.s32.totalorder %s180, %s194
    %p196 = scmp.eq.s32.totalorder %s23, 0
    %p197 = por %p195, %p196
    %s199 = sadd.s32 %s198, 1
    %p202 = scmp.eq.s32.totalorder %s17, 1
    %p203 = scmp.ne.s32.totalorder %s198, %s200
    %p204 = scmp.eq.s32.totalorder %s17, 0
    %p205 = por %p203, %p204
    %p206 = scmp.ne.s32.totalorder %s198, %s200
    %p207 = scmp.eq.s32.totalorder %s22, 1
    %p208 = por %p206, %p207
    %p209 = scmp.ne.s32.totalorder %s200, %s201
    %p210 = scmp.eq.s32.totalorder %s22, 0
    %p211 = por %p209, %p210
    %p212 = scmp.ne.s32.totalorder %s200, %s201
    %p213 = scmp.eq.s32.totalorder %s23, 1
    %p214 = por %p212, %p213
    %p216 = scmp.ne.s32.totalorder %s201, %s215
    %p217 = scmp.eq.s32.totalorder %s23, 0
    %p218 = por %p216, %p217
    %s219 = ssub.s32 %s17, %s24
    %p220 = scmp.eq.s32.totalorder %s219, 0
    %s222 = sadd.s32 %s221, 1
    %s223 = scalar_select %p220, %s221, %s222
    %p226 = pneg %p220
    %p227 = scmp.eq.s32.totalorder %s17, 1
    %p228 = por %p226, %p227
    %p229 = scmp.ne.s32.totalorder %s221, %s224
    %p230 = scmp.eq.s32.totalorder %s17, 0
    %p231 = por %p229, %p230
    %p232 = scmp.ne.s32.totalorder %s221, %s224
    %p233 = scmp.eq.s32.totalorder %s22, 1
    %p234 = por %p232, %p233
    %p235 = scmp.ne.s32.totalorder %s224, %s225
    %p236 = scmp.eq.s32.totalorder %s22, 0
    %p237 = por %p235, %p236
    %p238 = scmp.ne.s32.totalorder %s224, %s225
    %p239 = scmp.eq.s32.totalorder %s23, 1
    %p240 = por %p238, %p239
    %p242 = scmp.ne.s32.totalorder %s225, %s241
    %p243 = scmp.eq.s32.totalorder %s23, 0
    %p244 = por %p242, %p243
    %p245 = scmp.le.s32.totalorder 1, %s17
    %p246 = scmp.lt.s32.totalorder %s17, 3
    %p247 = pnand %p245, %p246
    %p248 = pneg %p247
    // Predicated region
    $region9: #{tpu_custom_call.1} parent=5 // pred_check
      _
    $region10: #{tpu_custom_call.1} parent=5 // pred_check_branch
      %250 = sbr.rel (%p247) target = $region12
    $region11: #{tpu_custom_call.1} parent=5 // pred_region
      %s251 = ssub.s32 %s17, 1
      // Predicated region
      $region13: #{tpu_custom_call.1} parent=11 // pred_check
        %p252 = pneg %p64
      $region14: #{tpu_custom_call.1} parent=11 // pred_check_branch
        %254 = sbr.rel (%p252) target = $region16
      $region15: #{tpu_custom_call.1} parent=11 // pred_region
        _
      $region16: #{tpu_custom_call.1} parent=11 // pred_fallthru
        _
      // Predicated region
      $region17: #{tpu_custom_call.1} parent=11 // pred_check
        %p255 = pneg %p85
      $region18: #{tpu_custom_call.1} parent=11 // pred_check_branch
        %257 = sbr.rel (%p255) target = $region20
      $region19: #{tpu_custom_call.1} parent=11 // pred_region
        _
      $region20: #{tpu_custom_call.1} parent=11 // pred_fallthru
        _
      // Predicated region
      $region21: #{tpu_custom_call.1} parent=11 // pred_check
        %p258 = pneg %p106
      $region22: #{tpu_custom_call.1} parent=11 // pred_check_branch
        %260 = sbr.rel (%p258) target = $region24
      $region23: #{tpu_custom_call.1} parent=11 // pred_region
        _
      $region24: #{tpu_custom_call.1} parent=11 // pred_fallthru
        _
      // Predicated region
      $region25: #{tpu_custom_call.1} parent=11 // pred_check
        %p261 = pneg %p127
      $region26: #{tpu_custom_call.1} parent=11 // pred_check_branch
        %263 = sbr.rel (%p261) target = $region28
      $region27: #{tpu_custom_call.1} parent=11 // pred_region
        _
      $region28: #{tpu_custom_call.1} parent=11 // pred_fallthru
        _
      // Predicated region
      $region29: #{tpu_custom_call.1} parent=11 // pred_check
        %p264 = pneg %p148
      $region30: #{tpu_custom_call.1} parent=11 // pred_check_branch
        %266 = sbr.rel (%p264) target = $region32
      $region31: #{tpu_custom_call.1} parent=11 // pred_region
        _
      $region32: #{tpu_custom_call.1} parent=11 // pred_fallthru
        _
      // Predicated region
      $region33: #{tpu_custom_call.1} parent=11 // pred_check
        %p267 = pneg %p169
      $region34: #{tpu_custom_call.1} parent=11 // pred_check_branch
        %269 = sbr.rel (%p267) target = $region36
      $region35: #{tpu_custom_call.1} parent=11 // pred_region
        _
      $region36: #{tpu_custom_call.1} parent=11 // pred_fallthru
        _
      // Predicated region
      $region37: #{tpu_custom_call.1} parent=11 // pred_check
        %p270 = pneg %p190
      $region38: #{tpu_custom_call.1} parent=11 // pred_check_branch
        %272 = sbr.rel (%p270) target = $region40
      $region39: #{tpu_custom_call.1} parent=11 // pred_region
        _
      $region40: #{tpu_custom_call.1} parent=11 // pred_fallthru
        _
      // Predicated region
      $region41: #{tpu_custom_call.1} parent=11 // pred_check
        %p273 = pneg %p211
      $region42: #{tpu_custom_call.1} parent=11 // pred_check_branch
        %275 = sbr.rel (%p273) target = $region44
      $region43: #{tpu_custom_call.1} parent=11 // pred_region
        _
      $region44: #{tpu_custom_call.1} parent=11 // pred_fallthru
        _
    $region12: #{tpu_custom_call.1} parent=5 // pred_fallthru
      _
    %p276 = scmp.lt.s32.totalorder %s17, 2
    // Predicated region
    $region45: #{tpu_custom_call.1} parent=5 // pred_check
      %p277 = pneg %p276
    $region46: #{tpu_custom_call.1} parent=5 // pred_check_branch
      %279 = sbr.rel (%p277) target = $region48
    $region47: #{tpu_custom_call.1} parent=5 // pred_region
      // Predicated region
      $region49: #{tpu_custom_call.1} parent=47 // pred_check
        %p280 = pneg %p37
      $region50: #{tpu_custom_call.1} parent=47 // pred_check_branch
        %282 = sbr.rel (%p280) target = $region52
      $region51: #{tpu_custom_call.1} parent=47 // pred_region
        %p283 = scmp.lt.s32.totalorder %s17, 1
        %s284 = scalar_select %p283, %s17, 1
        %s285 = smul.addr %s284, 8
        %s286 = scalar_lea.vmem %s0, %s285
      $region52: #{tpu_custom_call.1} parent=47 // pred_fallthru
        _
    $region48: #{tpu_custom_call.1} parent=5 // pred_fallthru
      _
    %p287 = scmp.le.s32.totalorder 1, %s17
    %p288 = scmp.lt.s32.totalorder %s17, 3
    %p289 = pnand %p287, %p288
    %p290 = pneg %p289
    // Predicated region
    $region53: #{tpu_custom_call.1} parent=5 // pred_check
      _
    $region54: #{tpu_custom_call.1} parent=5 // pred_check_branch
      %292 = sbr.rel (%p289) target = $region56
    $region55: #{tpu_custom_call.1} parent=5 // pred_region
      %s293 = ssub.s32 %s17, 1
      %p294 = scmp.lt.s32.totalorder %s22, 1
      %s295 = scalar_select %p294, %s22, 1
      %s296 = smul.addr %s295, 8
      %s297 = scalar_lea.vmem %s0, %s296
      %p298 = pneg %p43
      %p299 = pneg %p40
      %p300 = pneg %p64
      %p301 = pneg %p61
      %p302 = pneg %p85
      %p303 = pneg %p82
      %p304 = pneg %p106
      %p305 = pneg %p103
      %p306 = pneg %p127
      %p307 = pneg %p124
      %p308 = pneg %p148
      %p309 = pneg %p145
      %p310 = pneg %p169
      %p311 = pneg %p166
      %p312 = pneg %p190
      %p313 = pneg %p187
      %p314 = pneg %p211
      %p315 = pneg %p208
      %p316 = pneg %p237
      %p317 = pneg %p234
      %p318 = scmp.lt.s32.totalorder %s22, 1
      %s319 = scalar_select %p318, %s22, 1
      %s320 = smul.addr %s319, 8
      %s321 = scalar_lea.vmem %s9, %s320
      %p322 = scmp.lt.s32.totalorder %s22, 1
      %s323 = scalar_select %p322, %s22, 1
      %s324 = smul.addr %s323, 8
      %s325 = scalar_lea.vmem %s0, %s324
      %p326 = scmp.lt.s32.totalorder %s22, 1
      %s327 = scalar_select %p326, %s22, 1
      %s328 = smul.addr %s327, 8
      %s329 = scalar_lea.vmem %s9, %s328
      %v331 = vld [vmem:[%s325] sm:$0xff]
      %v332 = vpack.c.bf16 %v331, %v331
      %v333 = vld [vmem:[%s1] sm:$0xf]
      %v334 = vld [vmem:[%s1 + $0x4] sm:$0xf]
      %v335 = vld [vmem:[%s1 + $0x8] sm:$0xf]
      %v336 = vld [vmem:[%s1 + $0xc] sm:$0xf]
      %v337 = vld [vmem:[%s1 + $0x10] sm:$0xf]
      %v338 = vld [vmem:[%s1 + $0x14] sm:$0xf]
      %v339 = vld [vmem:[%s1 + $0x18] sm:$0xf]
      %v340 = vld [vmem:[%s1 + $0x1c] sm:$0xf]
      %v341 = vld [vmem:[%s2] sm:$0x1]
      %v343 = vperm.slane %v341, 0
      %v353 = vunpack.c.l.b16 %v333
      %v354 = vunpack.c.l.b16 %v334
      %v355 = vunpack.c.l.b16 %v335
      %v356 = vunpack.c.l.b16 %v336
      %v357 = vunpack.c.l.b16 %v337
      %v358 = vunpack.c.l.b16 %v338
      %v359 = vunpack.c.l.b16 %v339
      %v360 = vunpack.c.l.b16 %v340
      %v361 = vpack.c.b16 %v354, %v353
      %v362 = vpack.c.b16 %v356, %v355
      %v363 = vpack.c.b16 %v358, %v357
      %v364 = vpack.c.b16 %v360, %v359
      %vm369 = vcmask 523264
      %v371 = vsel %vm369, %v332, 0
      %373 = vmatpush.bf16.msra.mxu0 0
      %374 = vmatpush.bf16.msra.mxu0 0
      %375 = vmatpush.bf16.msra.mxu0 0
      %376 = vmatpush.bf16.msra.mxu0 0
      %377 = vmatpush.bf16.msra.mxu0 %v364
      %378 = vmatpush.bf16.msra.mxu0 %v363
      %379 = vmatpush.bf16.msra.mxu0 %v362
      %380 = vmatpush.bf16.msra.mxu0 %v361
      %381 = vmatmul.bf16.gmra.mxu0 %v371
      %v382 = vpop.f32.mrf.mxu0
      %v383 = vadd.f32 %v343, %v382
      %v384 = vpop.f32.mrf.mxu0
      %385 = vdwg.mxu0
      %v386 = vmax.f32 %v383, 0.0
      %v387 = vpack.c.bf16 %v386, %v386
      %v388 = vld [vmem:[%s3] sm:$0xf]
      %v389 = vld [vmem:[%s3 + $0x4] sm:$0xf]
      %v390 = vld [vmem:[%s3 + $0x8] sm:$0xf]
      %v391 = vld [vmem:[%s3 + $0xc] sm:$0xf]
      %v392 = vld [vmem:[%s3 + $0x10] sm:$0xf]
      %v393 = vld [vmem:[%s3 + $0x14] sm:$0xf]
      %v394 = vld [vmem:[%s3 + $0x18] sm:$0xf]
      %v395 = vld [vmem:[%s3 + $0x1c] sm:$0xf]
      %v396 = vld [vmem:[%s3 + $0x20] sm:$0xf]
      %v397 = vld [vmem:[%s3 + $0x24] sm:$0xf]
      %v398 = vld [vmem:[%s3 + $0x28] sm:$0xf]
      %v399 = vld [vmem:[%s3 + $0x2c] sm:$0xf]
      %v400 = vld [vmem:[%s3 + $0x30] sm:$0xf]
      %v401 = vld [vmem:[%s3 + $0x34] sm:$0xf]
      %v402 = vld [vmem:[%s3 + $0x38] sm:$0xf]
      %v403 = vld [vmem:[%s3 + $0x3c] sm:$0xf]
      %v404 = vld [vmem:[%s4] sm:$0x1]
      %v406 = vperm.slane %v404, 0
      %v424 = vunpack.c.l.b16 %v388
      %v425 = vunpack.c.l.b16 %v389
      %v426 = vunpack.c.l.b16 %v390
      %v427 = vunpack.c.l.b16 %v391
      %v428 = vunpack.c.l.b16 %v392
      %v429 = vunpack.c.l.b16 %v393
      %v430 = vunpack.c.l.b16 %v394
      %v431 = vunpack.c.l.b16 %v395
      %v432 = vunpack.c.l.b16 %v396
      %v433 = vunpack.c.l.b16 %v397
      %v434 = vunpack.c.l.b16 %v398
      %v435 = vunpack.c.l.b16 %v399
      %v436 = vunpack.c.l.b16 %v400
      %v437 = vunpack.c.l.b16 %v401
      %v438 = vunpack.c.l.b16 %v402
      %v439 = vunpack.c.l.b16 %v403
      %v440 = vpack.c.b16 %v425, %v424
      %v441 = vpack.c.b16 %v427, %v426
      %v442 = vpack.c.b16 %v429, %v428
      %v443 = vpack.c.b16 %v431, %v430
      %v444 = vpack.c.b16 %v433, %v432
      %v445 = vpack.c.b16 %v435, %v434
      %v446 = vpack.c.b16 %v437, %v436
      %v447 = vpack.c.b16 %v439, %v438
      %456 = vmatpush.bf16.msra.mxu0 %v447
      %457 = vmatpush.bf16.msra.mxu0 %v446
      %458 = vmatpush.bf16.msra.mxu0 %v445
      %459 = vmatpush.bf16.msra.mxu0 %v444
      %460 = vmatpush.bf16.msra.mxu0 %v443
      %461 = vmatpush.bf16.msra.mxu0 %v442
      %462 = vmatpush.bf16.msra.mxu0 %v441
      %463 = vmatpush.bf16.msra.mxu0 %v440
      %464 = vmatmul.bf16.gmra.mxu0 %v387
      %v465 = vpop.f32.mrf.mxu0
      %v466 = vadd.f32 %v406, %v465
      %v467 = vpop.f32.mrf.mxu0
      %468 = vdwg.mxu0
      %v469 = vmax.f32 %v466, 0.0
      %v470 = vpack.c.bf16 %v469, %v469
      %v471 = vld [vmem:[%s5] sm:$0xf]
      %v472 = vld [vmem:[%s5 + $0x4] sm:$0xf]
      %v473 = vld [vmem:[%s5 + $0x8] sm:$0xf]
      %v474 = vld [vmem:[%s5 + $0xc] sm:$0xf]
      %v475 = vld [vmem:[%s5 + $0x10] sm:$0xf]
      %v476 = vld [vmem:[%s5 + $0x14] sm:$0xf]
      %v477 = vld [vmem:[%s5 + $0x18] sm:$0xf]
      %v478 = vld [vmem:[%s5 + $0x1c] sm:$0xf]
      %v479 = vld [vmem:[%s6] sm:$0x1]
      %v481 = vperm.slane %v479, 0
      %v491 = vunpack.c.l.b16 %v471
      %v492 = vunpack.c.l.b16 %v472
      %v493 = vunpack.c.l.b16 %v473
      %v494 = vunpack.c.l.b16 %v474
      %v495 = vunpack.c.l.b16 %v475
      %v496 = vunpack.c.l.b16 %v476
      %v497 = vunpack.c.l.b16 %v477
      %v498 = vunpack.c.l.b16 %v478
      %v499 = vpack.c.b16 %v492, %v491
      %v500 = vpack.c.b16 %v494, %v493
      %v501 = vpack.c.b16 %v496, %v495
      %v502 = vpack.c.b16 %v498, %v497
      %v508 = vsel %vm369, %v470, 0
      %510 = vmatpush.bf16.msra.mxu0 0
      %511 = vmatpush.bf16.msra.mxu0 0
      %512 = vmatpush.bf16.msra.mxu0 0
      %513 = vmatpush.bf16.msra.mxu0 0
      %514 = vmatpush.bf16.msra.mxu0 %v502
      %515 = vmatpush.bf16.msra.mxu0 %v501
      %516 = vmatpush.bf16.msra.mxu0 %v500
      %517 = vmatpush.bf16.msra.mxu0 %v499
      %518 = vmatmul.bf16.gmra.mxu0 %v508
      %v519 = vpop.f32.mrf.mxu0
      %v520 = vadd.f32 %v481, %v519
      %v521 = vpop.f32.mrf.mxu0
      %522 = vdwg.mxu0
      %v523 = vmax.f32 %v520, 0.0
      %v524 = vld [vmem:[%s7] sm:$0x1]
      %v526 = vperm.slane %v524, 0
      %v528 = vmul.f32 %v523, %v526
      %vm529 = vcmask 130048
      %v530 = vsel %vm529, %v528, 0.0
      %531 = vadd.xlane.f32.xlu0 %v530
      %v532 = vpop.xlane.xlu0 %531
      %v533 = vld [vmem:[#allocation2] sm:$0x1]
      %v535 = vperm.slane %v533, 0
      %v537 = vadd.f32 %v532, %v535
      %v538 = vtanh.pop %v537
      %vm539 = vcmask 7168
      %540 = vst.msk [vmem:[%s329] sm:$0xff] %vm539, %v538
      %p541 = scmp.lt.s32.totalorder %s22, 1
      %s542 = scalar_select %p541, %s22, 1
      %s543 = smul.addr %s542, 8
      %s544 = scalar_lea.vmem %s9, %s543
      // Predicated region
      $region57: #{tpu_custom_call.1} parent=55 // pred_check
        %p545 = pneg %p234
      $region58: #{tpu_custom_call.1} parent=55 // pred_check_branch
        %547 = sbr.rel (%p545) target = $region60
      $region59: #{tpu_custom_call.1} parent=55 // pred_region
        _
      $region60: #{tpu_custom_call.1} parent=55 // pred_fallthru
        _
    $region56: #{tpu_custom_call.1} parent=5 // pred_fallthru
      _
    %p548 = scmp.le.s32.totalorder 2, %s17
    // Predicated region
    $region61: #{tpu_custom_call.1} parent=5 // pred_check
      %p549 = pneg %p548
    $region62: #{tpu_custom_call.1} parent=5 // pred_check_branch
      %551 = sbr.rel (%p549) target = $region64
    $region63: #{tpu_custom_call.1} parent=5 // pred_region
      %s552 = ssub.s32 %s17, 2
      // Predicated region
      $region65: #{tpu_custom_call.1} parent=63 // pred_check
        %p553 = pneg %p240
      $region66: #{tpu_custom_call.1} parent=63 // pred_check_branch
        %555 = sbr.rel (%p553) target = $region68
      $region67: #{tpu_custom_call.1} parent=63 // pred_region
        %p556 = scmp.lt.s32.totalorder %s23, 1
        %s557 = scalar_select %p556, %s23, 1
        %s558 = smul.addr %s557, 8
        %s559 = scalar_lea.vmem %s9, %s558
      $region68: #{tpu_custom_call.1} parent=63 // pred_fallthru
        _
    $region64: #{tpu_custom_call.1} parent=5 // pred_fallthru
      _
  $region6: #{tpu_custom_call.1} parent=0 // loop_footer
    %s21 = sadd.s32 1, %s17
  $region7: #{tpu_custom_call.1} parent=0 // loop_footer_branch
    %16 = sbr.rel target = $region3
  $region8: #{tpu_custom_call.1} parent=0 // loop_exit
    _

</llo_original>
